<compile_context>
chip_gen: v7x
topology: tpu7x:2x2x1
jax: 0.10.0
libtpu: 0.0.40
codegen_flags: <defaults>
</compile_context>

<pallas_src>
import functools

import jax
import jax.numpy as jnp
from jax.experimental import pallas as pl
from jax.experimental.pallas import tpu as pltpu

LANE = 128  # lane-dense padded class dimension for the kernel output slab


# --------------------------- fused forward kernel ---------------------------
def _fused_forward_kernel(cols_ref, wconv_ref, bconv_ref, wfc_ref, bfc_ref,
                          out_ref, *, batch, hw, num_classes):
    # cols_ref:  (B*HW, 9*C)  im2col patches (lane-packed taps)
    # wconv_ref: (9*C, F)     conv weight flattened over taps+channels
    # bconv_ref: (1, F)       conv bias
    # wfc_ref:   (F, KP)      fc weight, classes zero-padded to KP = 128
    # bfc_ref:   (1, KP)      fc bias,   classes zero-padded to KP = 128
    # out_ref:   (B, KP) f32  lane-dense slab: [:, :K] logits, [:, K] argmax idx
    F = wconv_ref.shape[-1]
    KP = wfc_ref.shape[-1]

    # conv3x3 (stride 1, pad 1) as a single im2col matmul; MXU accumulates
    # internally along K = 9*C (no per-tap VPU accumulation, no relayouts).
    acc = jnp.dot(cols_ref[...], wconv_ref[...],
                  preferred_element_type=jnp.float32)              # (B*HW, F)
    acc = jnp.maximum(acc + bconv_ref[...], 0.0)                   # bias + ReLU

    # global average pool per image: (B*HW, F) -> (B, F); scale folded.
    feat = jnp.sum(acc.reshape(batch, hw, F), axis=1) * (1.0 / hw)

    # fc: lane-dense logits (padded classes carry zero weight / zero bias)
    logits = jnp.dot(feat, wfc_ref[...],
                     preferred_element_type=jnp.float32) + bfc_ref[...]

    # argmax over the real classes only; first-max index (torch.max ties)
    col = jax.lax.broadcasted_iota(jnp.int32, (batch, KP), 1)
    masked = jnp.where(col < num_classes, logits, jnp.finfo(jnp.float32).min)
    m = jnp.max(masked, axis=1, keepdims=True)
    big = jnp.iinfo(jnp.int32).max
    idx = jnp.min(jnp.where(masked == m, col, big), axis=1, keepdims=True)

    # Pack the index (exact in f32 since idx < 128) into the spare padded
    # lane `num_classes` -> single lane-dense output, one unmasked vst stream.
    out_ref[...] = jnp.where(col == num_classes,
                             idx.astype(jnp.float32), logits)


# --------------------------- one-time parameter prep -------------------------
def prepare_params(w_conv, b_conv, w_fc, b_fc):
    """Hoisted out of the per-call path: run ONCE at init.

    w_conv: (3, 3, C, F)  (PyTorch Conv2d weight (F,C,3,3) maps via
                           transpose(2, 3, 1, 0))
    b_conv: (F,)   w_fc: (F, K)   b_fc: (K,)
    """
    KH, KW, C, F = w_conv.shape
    K = w_fc.shape[-1]
    assert K < LANE, "need one spare padded lane for the packed argmax index"
    return {
        "w_conv_col": w_conv.reshape(KH * KW * C, F).astype(jnp.float32),
        "b_conv": b_conv.reshape(1, F).astype(jnp.float32),
        "w_fc_p": jnp.zeros((F, LANE), jnp.float32).at[:, :K].set(w_fc),
        "b_fc_p": jnp.zeros((1, LANE), jnp.float32).at[:, :K].set(b_fc),
    }


# ------------------------------- wrapper -------------------------------------
def method_forward(x_nchw, params, *, num_classes):
    """Method.forward(x) -> (predicted, prediction)."""
    B, C, H, W = x_nchw.shape
    w_conv_col = params["w_conv_col"]
    b_conv = params["b_conv"]
    w_fc_p = params["w_fc_p"]
    b_fc_p = params["b_fc_p"]
    F = w_conv_col.shape[-1]
    NINE_C = w_conv_col.shape[0]              # 9 * C
    M = B * H * W
    K = num_classes

    # im2col slab (M, 9*C): tap-major, channel-minor — matches the
    # (3,3,C,F)->(9*C,F) weight flattening.  Under jit the transpose + pad +
    # shifted slices + concat + reshape fuse into one tiny producer op.
    x_nhwc = jnp.transpose(x_nchw, (0, 2, 3, 1))
    xp = jnp.pad(x_nhwc, ((0, 0), (1, 1), (1, 1), (0, 0)))
    cols = jnp.concatenate(
        [xp[:, di:di + H, dj:dj + W, :] for di in range(3) for dj in range(3)],
        axis=-1).reshape(M, NINE_C)

    kernel = functools.partial(_fused_forward_kernel,
                               batch=B, hw=H * W, num_classes=K)

    flops = 2 * M * NINE_C * F + 2 * B * F * LANE
    bytes_accessed = 4 * (cols.size + w_conv_col.size + b_conv.size
                          + w_fc_p.size + b_fc_p.size + B * LANE)
    cost = pl.CostEstimate(flops=flops, transcendentals=0,
                           bytes_accessed=bytes_accessed)

    # NOTE: on v7x (2 TensorCores, 64 MiB VMEM) switch to grid=(B,) with
    # per-image blocks + dimension_semantics=("parallel",) once B*H*W grows;
    # on single-TC v5e/v6e the single whole-batch grid step is optimal.
    out = pl.pallas_call(
        kernel,
        out_shape=jax.ShapeDtypeStruct((B, LANE), jnp.float32),
        grid=(1,),
        in_specs=[
            pl.BlockSpec((M, NINE_C), lambda i: (0, 0)),
            pl.BlockSpec((NINE_C, F), lambda i: (0, 0)),
            pl.BlockSpec((1, F), lambda i: (0, 0)),
            pl.BlockSpec((F, LANE), lambda i: (0, 0)),
            pl.BlockSpec((1, LANE), lambda i: (0, 0)),
        ],
        out_specs=pl.BlockSpec((B, LANE), lambda i: (0, 0)),
        compiler_params=pltpu.CompilerParams(
            dimension_semantics=("arbitrary",),
            vmem_limit_bytes=32 * 1024 * 1024),
        cost_estimate=cost,
    )(cols, w_conv_col, b_conv, w_fc_p, b_fc_p)

    prediction = out[:, :K]                    # (B, K) logits
    predicted = out[:, K].astype(jnp.int32)    # (B,)   argmax (packed lane)
    return predicted, prediction


# --------------------------------- main --------------------------------------
if __name__ == "__main__":
    B, C, H, W = 2, 4, 16, 16       # input images (NCHW)
    FEAT = 32                       # network.out_features
    NUM_CLASSES = 16

    key = jax.random.PRNGKey(0)
    kx, kwc, kbc, kwf, kbf = jax.random.split(key, 5)

    x = jax.random.normal(kx, (B, C, H, W), dtype=jnp.float32)
    w_conv = jax.random.normal(kwc, (3, 3, C, FEAT), dtype=jnp.float32) * 0.1
    b_conv = jax.random.normal(kbc, (FEAT,), dtype=jnp.float32) * 0.01
    w_fc = jax.random.normal(kwf, (FEAT, NUM_CLASSES), dtype=jnp.float32) * 0.1
    b_fc = jax.random.normal(kbf, (NUM_CLASSES,), dtype=jnp.float32) * 0.01

    params = prepare_params(w_conv, b_conv, w_fc, b_fc)     # one-time init
    fwd = jax.jit(functools.partial(method_forward, num_classes=NUM_CLASSES))
    predicted, prediction = fwd(x, params)
    jax.block_until_ready((predicted, prediction))

    # lightweight correctness check against a pure-JAX reference
    x_nhwc = jnp.transpose(x, (0, 2, 3, 1))
    xp_ref = jnp.pad(x_nhwc, ((0, 0), (1, 1), (1, 1), (0, 0)))
    y = jnp.zeros((B, H, W, FEAT), jnp.float32)
    for di in range(3):
        for dj in range(3):
            y = y + jnp.einsum('bhwc,cf->bhwf',
                               xp_ref[:, di:di + H, dj:dj + W, :], w_conv[di, dj])
    y = jnp.maximum(y + b_conv, 0.0)
    feat_ref = jnp.mean(y, axis=(1, 2))
    logits_ref = feat_ref @ w_fc + b_fc
    pred_ref = jnp.argmax(logits_ref, axis=1).astype(jnp.int32)

    assert jnp.allclose(prediction, logits_ref, atol=1e-4, rtol=1e-4)
    assert jnp.array_equal(predicted, pred_ref)

    print("KERNEL_OK")
</pallas_src>

<mosaic_0001>
module attributes {stable_mosaic.version = 11 : i64} {
  func.func @_fused_forward_kernel(%arg0: i32, %arg1: memref<512x36xf32, #tpu.memory_space<vmem>>, %arg2: memref<36x32xf32, #tpu.memory_space<vmem>>, %arg3: memref<1x32xf32, #tpu.memory_space<vmem>>, %arg4: memref<32x128xf32, #tpu.memory_space<vmem>>, %arg5: memref<1x128xf32, #tpu.memory_space<vmem>>, %arg6: memref<2x128xf32, #tpu.memory_space<vmem>>) attributes {dimension_semantics = [#tpu.dimension_semantics<arbitrary>], iteration_bounds = array<i64: 1>, scalar_prefetch = 0 : i64, scratch_operands = 0 : i64, tpu.core_type = #tpu.core_type<tc>, window_params = [{pipeline_mode = #tpu.pipeline_mode<synchronous>, transform_indices = @transform_0, window_bounds = array<i64: 512, 36>}, {pipeline_mode = #tpu.pipeline_mode<synchronous>, transform_indices = @transform_1, window_bounds = array<i64: 36, 32>}, {pipeline_mode = #tpu.pipeline_mode<synchronous>, transform_indices = @transform_2, window_bounds = array<i64: 1, 32>}, {pipeline_mode = #tpu.pipeline_mode<synchronous>, transform_indices = @transform_3, window_bounds = array<i64: 32, 128>}, {pipeline_mode = #tpu.pipeline_mode<synchronous>, transform_indices = @transform_4, window_bounds = array<i64: 1, 128>}, {pipeline_mode = #tpu.pipeline_mode<synchronous>, transform_indices = @transform_5, window_bounds = array<i64: 2, 128>}]} {
    %c0 = arith.constant 0 : index
    %c0_0 = arith.constant 0 : index
    %0 = vector.load %arg1[%c0, %c0_0] : memref<512x36xf32, #tpu.memory_space<vmem>>, vector<512x36xf32>
    %c0_1 = arith.constant 0 : index
    %c0_2 = arith.constant 0 : index
    %1 = vector.load %arg2[%c0_1, %c0_2] : memref<36x32xf32, #tpu.memory_space<vmem>>, vector<36x32xf32>
    %cst = arith.constant dense<0.000000e+00> : vector<512x32xf32>
    %2 = tpu.matmul %0, %1, %cst {dimension_numbers = #tpu.dot_dimension_numbers<[1], [0], [0], [1], [0, 0, 1, 1], [], []>} : vector<512x36xf32>, vector<36x32xf32>, vector<512x32xf32> -> vector<512x32xf32>
    %c0_3 = arith.constant 0 : index
    %c0_4 = arith.constant 0 : index
    %3 = vector.load %arg3[%c0_3, %c0_4] : memref<1x32xf32, #tpu.memory_space<vmem>>, vector<1x32xf32>
    %4 = vector.broadcast %3 : vector<1x32xf32> to vector<512x32xf32>
    %5 = arith.addf %2, %4 : vector<512x32xf32>
    %cst_5 = arith.constant 0.000000e+00 : f32
    %6 = vector.broadcast %cst_5 : f32 to vector<512x32xf32>
    %7 = arith.maximumf %5, %6 : vector<512x32xf32>
    %8 = vector.shape_cast %7 : vector<512x32xf32> to vector<2x256x32xf32>
    %cst_6 = arith.constant dense<0.000000e+00> : vector<2x32xf32>
    %9 = vector.multi_reduction <add>, %8, %cst_6 [1] : vector<2x256x32xf32> to vector<2x32xf32>
    %cst_7 = arith.constant 3.906250e-03 : f32
    %10 = vector.broadcast %cst_7 : f32 to vector<2x32xf32>
    %11 = arith.mulf %9, %10 : vector<2x32xf32>
    %c0_8 = arith.constant 0 : index
    %c0_9 = arith.constant 0 : index
    %12 = vector.load %arg4[%c0_8, %c0_9] : memref<32x128xf32, #tpu.memory_space<vmem>>, vector<32x128xf32>
    %cst_10 = arith.constant dense<0.000000e+00> : vector<2x128xf32>
    %13 = tpu.matmul %11, %12, %cst_10 {dimension_numbers = #tpu.dot_dimension_numbers<[1], [0], [0], [1], [0, 0, 1, 1], [], []>} : vector<2x32xf32>, vector<32x128xf32>, vector<2x128xf32> -> vector<2x128xf32>
    %c0_11 = arith.constant 0 : index
    %c0_12 = arith.constant 0 : index
    %14 = vector.load %arg5[%c0_11, %c0_12] : memref<1x128xf32, #tpu.memory_space<vmem>>, vector<1x128xf32>
    %15 = vector.broadcast %14 : vector<1x128xf32> to vector<2x128xf32>
    %16 = arith.addf %13, %15 : vector<2x128xf32>
    %17 = tpu.iota {dimensions = array<i32: 1>} : vector<2x128xi32>
    %c16_i32 = arith.constant 16 : i32
    %18 = vector.broadcast %c16_i32 : i32 to vector<2x128xi32>
    %19 = arith.cmpi slt, %17, %18 : vector<2x128xi32>
    %cst_13 = arith.constant -3.40282347E+38 : f32
    %20 = vector.broadcast %cst_13 : f32 to vector<2x128xf32>
    %21 = arith.select %19, %16, %20 : vector<2x128xi1>, vector<2x128xf32>
    %cst_14 = arith.constant dense<0xFF800000> : vector<2xf32>
    %22 = vector.multi_reduction <maximumf>, %21, %cst_14 [1] : vector<2x128xf32> to vector<2xf32>
    %23 = vector.shape_cast %22 : vector<2xf32> to vector<2x1xf32>
    %24 = vector.broadcast %23 : vector<2x1xf32> to vector<2x128xf32>
    %25 = arith.cmpf oeq, %21, %24 : vector<2x128xf32>
    %c2147483647_i32 = arith.constant 2147483647 : i32
    %26 = vector.broadcast %c2147483647_i32 : i32 to vector<2x128xi32>
    %27 = arith.select %25, %17, %26 : vector<2x128xi1>, vector<2x128xi32>
    %cst_15 = arith.constant dense<2147483647> : vector<2xi32>
    %28 = vector.multi_reduction <minsi>, %27, %cst_15 [1] : vector<2x128xi32> to vector<2xi32>
    %29 = vector.shape_cast %28 : vector<2xi32> to vector<2x1xi32>
    %c16_i32_16 = arith.constant 16 : i32
    %30 = vector.broadcast %c16_i32_16 : i32 to vector<2x128xi32>
    %31 = arith.cmpi eq, %17, %30 : vector<2x128xi32>
    %32 = arith.sitofp %29 : vector<2x1xi32> to vector<2x1xf32>
    %33 = vector.shape_cast %32 : vector<2x1xf32> to vector<2x1xf32>
    %34 = vector.broadcast %33 : vector<2x1xf32> to vector<2x128xf32>
    %35 = arith.select %31, %34, %16 : vector<2x128xi1>, vector<2x128xf32>
    %c0_17 = arith.constant 0 : index
    %c0_18 = arith.constant 0 : index
    %36 = vector.load %arg6[%c0_17, %c0_18] : memref<2x128xf32, #tpu.memory_space<vmem>>, vector<2x128xf32>
    tpu.vector_store %arg6[%c0_17, %c0_18], %35 {strides = array<i32>} : memref<2x128xf32, #tpu.memory_space<vmem>>, vector<2x128xf32>,
    return
  }
  func.func @transform_0(%arg0: i32) -> (i32, i32) {
    %c0_i32 = arith.constant 0 : i32
    %c0_i32_0 = arith.constant 0 : i32
    %c0_i32_1 = arith.constant 0 : i32
    return %c0_i32, %c0_i32_0 : i32, i32
  }
  func.func @transform_1(%arg0: i32) -> (i32, i32) {
    %c0_i32 = arith.constant 0 : i32
    %c0_i32_0 = arith.constant 0 : i32
    %c0_i32_1 = arith.constant 0 : i32
    return %c0_i32, %c0_i32_0 : i32, i32
  }
  func.func @transform_2(%arg0: i32) -> (i32, i32) {
    %c0_i32 = arith.constant 0 : i32
    %c0_i32_0 = arith.constant 0 : i32
    %c0_i32_1 = arith.constant 0 : i32
    return %c0_i32, %c0_i32_0 : i32, i32
  }
  func.func @transform_3(%arg0: i32) -> (i32, i32) {
    %c0_i32 = arith.constant 0 : i32
    %c0_i32_0 = arith.constant 0 : i32
    %c0_i32_1 = arith.constant 0 : i32
    return %c0_i32, %c0_i32_0 : i32, i32
  }
  func.func @transform_4(%arg0: i32) -> (i32, i32) {
    %c0_i32 = arith.constant 0 : i32
    %c0_i32_0 = arith.constant 0 : i32
    %c0_i32_1 = arith.constant 0 : i32
    return %c0_i32, %c0_i32_0 : i32, i32
  }
  func.func @transform_5(%arg0: i32) -> (i32, i32) {
    %c0_i32 = arith.constant 0 : i32
    %c0_i32_0 = arith.constant 0 : i32
    %c0_i32_1 = arith.constant 0 : i32
    return %c0_i32, %c0_i32_0 : i32, i32
  }
}

</mosaic_0001>

<llo_original>
// kernel: method_forward.1
$region0: #{method_forward.1}
  #allocation0 [shape = 'u32[]', space=smem, size = 0x4, offset = 0x4, fixed_abs, tag = 'smem constant byte address 0x4 - core index']
  #allocation1 [shape = 'u32[144,128]{1,0:T(1,128)}', space=vmem, size = 0x12000, scoped, tag = 'internal scratch']
  %s0 = inlined_call_operand.vmem [shape: f32[512,36], index: 0, kind: input, shape index: {}]
  %s1 = inlined_call_operand.vmem [shape: f32[36,32], index: 1, kind: input, shape index: {}]
  %s2 = inlined_call_operand.vmem [shape: f32[1,32], index: 2, kind: input, shape index: {}]
  %s3 = inlined_call_operand.vmem [shape: f32[32,128], index: 3, kind: input, shape index: {}]
  %s4 = inlined_call_operand.vmem [shape: f32[1,128], index: 4, kind: input, shape index: {}]
  %s5 = inlined_call_operand.vmem [shape: f32[2,128], index: 5, kind: output, shape index: {}]
  %s6 = sld [smem:[#allocation0]]
  $region30: #{method_forward.1} parent=0
    _
  %s8 = ssub.s32 1, %s6
  %s9 = scalar_select 0, %s8, %s6
  // Predicated region
  $region2: #{method_forward.1} parent=0 // pred_check
    _
  $region3: #{method_forward.1} parent=0 // pred_check_branch
    %11 = sbr.rel (0) target = $region5
  $region4: #{method_forward.1} parent=0 // pred_region
    _
  $region5: #{method_forward.1} parent=0 // pred_fallthru
    _
  // Predicated region
  $region6: #{method_forward.1} parent=0 // pred_check
    _
  $region7: #{method_forward.1} parent=0 // pred_check_branch
    %13 = sbr.rel (0) target = $region9
  $region8: #{method_forward.1} parent=0 // pred_region
    _
  $region9: #{method_forward.1} parent=0 // pred_fallthru
    _
  // Predicated region
  $region10: #{method_forward.1} parent=0 // pred_check
    _
  $region11: #{method_forward.1} parent=0 // pred_check_branch
    %15 = sbr.rel (0) target = $region13
  $region12: #{method_forward.1} parent=0 // pred_region
    _
  $region13: #{method_forward.1} parent=0 // pred_fallthru
    _
  // Predicated region
  $region14: #{method_forward.1} parent=0 // pred_check
    _
  $region15: #{method_forward.1} parent=0 // pred_check_branch
    %17 = sbr.rel (0) target = $region17
  $region16: #{method_forward.1} parent=0 // pred_region
    _
  $region17: #{method_forward.1} parent=0 // pred_fallthru
    _
  // Predicated region
  $region18: #{method_forward.1} parent=0 // pred_check
    _
  $region19: #{method_forward.1} parent=0 // pred_check_branch
    %19 = sbr.rel (0) target = $region21
  $region20: #{method_forward.1} parent=0 // pred_region
    _
  $region21: #{method_forward.1} parent=0 // pred_fallthru
    _
  %v20 = vld [vmem:[%s0] sm:$0xff]
  %v21 = vld [vmem:[%s0 + $0x8] sm:$0xff]
  %v22 = vld [vmem:[%s0 + $0x10] sm:$0xff]
  %v23 = vld [vmem:[%s0 + $0x18] sm:$0xff]
  %v24 = vld [vmem:[%s0 + $0x20] sm:$0xff]
  %v25 = vld [vmem:[%s0 + $0x28] sm:$0xff]
  %v26 = vld [vmem:[%s0 + $0x30] sm:$0xff]
  %v27 = vld [vmem:[%s0 + $0x38] sm:$0xff]
  %v28 = vld [vmem:[%s0 + $0x40] sm:$0xff]
  %v29 = vld [vmem:[%s0 + $0x48] sm:$0xff]
  %v30 = vld [vmem:[%s0 + $0x50] sm:$0xff]
  %v31 = vld [vmem:[%s0 + $0x58] sm:$0xff]
  %v32 = vld [vmem:[%s0 + $0x60] sm:$0xff]
  %v33 = vld [vmem:[%s0 + $0x68] sm:$0xff]
  %v34 = vld [vmem:[%s0 + $0x70] sm:$0xff]
  %v35 = vld [vmem:[%s0 + $0x78] sm:$0xff]
  %v36 = vld [vmem:[%s0 + $0x80] sm:$0xff]
  %v37 = vld [vmem:[%s0 + $0x88] sm:$0xff]
  %v38 = vld [vmem:[%s0 + $0x90] sm:$0xff]
  %v39 = vld [vmem:[%s0 + $0x98] sm:$0xff]
  %v40 = vld [vmem:[%s0 + $0xa0] sm:$0xff]
  %v41 = vld [vmem:[%s0 + $0xa8] sm:$0xff]
  %v42 = vld [vmem:[%s0 + $0xb0] sm:$0xff]
  %v43 = vld [vmem:[%s0 + $0xb8] sm:$0xff]
  %v44 = vld [vmem:[%s0 + $0xc0] sm:$0xff]
  %v45 = vld [vmem:[%s0 + $0xc8] sm:$0xff]
  %v46 = vld [vmem:[%s0 + $0xd0] sm:$0xff]
  %v47 = vld [vmem:[%s0 + $0xd8] sm:$0xff]
  %v48 = vld [vmem:[%s0 + $0xe0] sm:$0xff]
  %v49 = vld [vmem:[%s0 + $0xe8] sm:$0xff]
  %v50 = vld [vmem:[%s0 + $0xf0] sm:$0xff]
  %v51 = vld [vmem:[%s0 + $0xf8] sm:$0xff]
  %v52 = vld [vmem:[%s0 + $0x100] sm:$0xff]
  %v53 = vld [vmem:[%s0 + $0x108] sm:$0xff]
  %v54 = vld [vmem:[%s0 + $0x110] sm:$0xff]
  %v55 = vld [vmem:[%s0 + $0x118] sm:$0xff]
  %v56 = vld [vmem:[%s0 + $0x120] sm:$0xff]
  %v57 = vld [vmem:[%s0 + $0x128] sm:$0xff]
  %v58 = vld [vmem:[%s0 + $0x130] sm:$0xff]
  %v59 = vld [vmem:[%s0 + $0x138] sm:$0xff]
  %v60 = vld [vmem:[%s0 + $0x140] sm:$0xff]
  %v61 = vld [vmem:[%s0 + $0x148] sm:$0xff]
  %v62 = vld [vmem:[%s0 + $0x150] sm:$0xff]
  %v63 = vld [vmem:[%s0 + $0x158] sm:$0xff]
  %v64 = vld [vmem:[%s0 + $0x160] sm:$0xff]
  %v65 = vld [vmem:[%s0 + $0x168] sm:$0xff]
  %v66 = vld [vmem:[%s0 + $0x170] sm:$0xff]
  %v67 = vld [vmem:[%s0 + $0x178] sm:$0xff]
  %v68 = vld [vmem:[%s0 + $0x180] sm:$0xff]
  %v69 = vld [vmem:[%s0 + $0x188] sm:$0xff]
  %v70 = vld [vmem:[%s0 + $0x190] sm:$0xff]
  %v71 = vld [vmem:[%s0 + $0x198] sm:$0xff]
  %v72 = vld [vmem:[%s0 + $0x1a0] sm:$0xff]
  %v73 = vld [vmem:[%s0 + $0x1a8] sm:$0xff]
  %v74 = vld [vmem:[%s0 + $0x1b0] sm:$0xff]
  %v75 = vld [vmem:[%s0 + $0x1b8] sm:$0xff]
  %v76 = vld [vmem:[%s0 + $0x1c0] sm:$0xff]
  %v77 = vld [vmem:[%s0 + $0x1c8] sm:$0xff]
  %v78 = vld [vmem:[%s0 + $0x1d0] sm:$0xff]
  %v79 = vld [vmem:[%s0 + $0x1d8] sm:$0xff]
  %v80 = vld [vmem:[%s0 + $0x1e0] sm:$0xff]
  %v81 = vld [vmem:[%s0 + $0x1e8] sm:$0xff]
  %v82 = vld [vmem:[%s0 + $0x1f0] sm:$0xff]
  %v83 = vld [vmem:[%s0 + $0x1f8] sm:$0xff]
  %v84 = vld [vmem:[%s1] sm:$0xff]
  %v85 = vld [vmem:[%s1 + $0x8] sm:$0xff]
  %v86 = vld [vmem:[%s1 + $0x10] sm:$0xff]
  %v87 = vld [vmem:[%s1 + $0x18] sm:$0xff]
  %v88 = vld [vmem:[%s1 + $0x20] sm:$0xf]
  %v89 = vld [vmem:[%s2] sm:$0x1]
  %v91 = vlaneseq
  %v92 = vshrl.u32 %v91, 7
  %v93 = vsub.s32 0, %v92
  %v94 = vrot.slane %v89, %v93
  %vm96 = vcmask 293888
  %v98 = vsel %vm96, %v20, 0
  %v101 = vsel %vm96, %v21, 0
  %v104 = vsel %vm96, %v22, 0
  %v107 = vsel %vm96, %v23, 0
  %v110 = vsel %vm96, %v24, 0
  %v113 = vsel %vm96, %v25, 0
  %v116 = vsel %vm96, %v26, 0
  %v119 = vsel %vm96, %v27, 0
  %v122 = vsel %vm96, %v28, 0
  %v125 = vsel %vm96, %v29, 0
  %v128 = vsel %vm96, %v30, 0
  %v131 = vsel %vm96, %v31, 0
  %v134 = vsel %vm96, %v32, 0
  %v137 = vsel %vm96, %v33, 0
  %v140 = vsel %vm96, %v34, 0
  %v143 = vsel %vm96, %v35, 0
  %v146 = vsel %vm96, %v36, 0
  %v149 = vsel %vm96, %v37, 0
  %v152 = vsel %vm96, %v38, 0
  %v155 = vsel %vm96, %v39, 0
  %v158 = vsel %vm96, %v40, 0
  %v161 = vsel %vm96, %v41, 0
  %v164 = vsel %vm96, %v42, 0
  %v167 = vsel %vm96, %v43, 0
  %v170 = vsel %vm96, %v44, 0
  %v173 = vsel %vm96, %v45, 0
  %v176 = vsel %vm96, %v46, 0
  %v179 = vsel %vm96, %v47, 0
  %v182 = vsel %vm96, %v48, 0
  %v185 = vsel %vm96, %v49, 0
  %v188 = vsel %vm96, %v50, 0
  %v191 = vsel %vm96, %v51, 0
  %v194 = vsel %vm96, %v52, 0
  %v197 = vsel %vm96, %v53, 0
  %v200 = vsel %vm96, %v54, 0
  %v203 = vsel %vm96, %v55, 0
  %v206 = vsel %vm96, %v56, 0
  %v209 = vsel %vm96, %v57, 0
  %v212 = vsel %vm96, %v58, 0
  %v215 = vsel %vm96, %v59, 0
  %v218 = vsel %vm96, %v60, 0
  %v221 = vsel %vm96, %v61, 0
  %v224 = vsel %vm96, %v62, 0
  %v227 = vsel %vm96, %v63, 0
  %v230 = vsel %vm96, %v64, 0
  %v233 = vsel %vm96, %v65, 0
  %v236 = vsel %vm96, %v66, 0
  %v239 = vsel %vm96, %v67, 0
  %v242 = vsel %vm96, %v68, 0
  %v245 = vsel %vm96, %v69, 0
  %v248 = vsel %vm96, %v70, 0
  %v251 = vsel %vm96, %v71, 0
  %v254 = vsel %vm96, %v72, 0
  %v257 = vsel %vm96, %v73, 0
  %v260 = vsel %vm96, %v74, 0
  %v263 = vsel %vm96, %v75, 0
  %v266 = vsel %vm96, %v76, 0
  %v269 = vsel %vm96, %v77, 0
  %v272 = vsel %vm96, %v78, 0
  %v275 = vsel %vm96, %v79, 0
  %v278 = vsel %vm96, %v80, 0
  %v281 = vsel %vm96, %v81, 0
  %v284 = vsel %vm96, %v82, 0
  %v287 = vsel %vm96, %v83, 0
  %vm289 = vcmask 1043456
  %v291 = vsel %vm289, %v88, 0
  %293 = vmatprep.subr.mxu0 0.0
  %294 = vmatpush1.msra.mxu0 %v84
  %295 = vmatprep.subr.mxu0 0.0
  %296 = vmatpush1.msra.mxu0 %v85
  %297 = vmatprep.subr.mxu0 0.0
  %298 = vmatpush1.msra.mxu0 %v86
  %299 = vmatprep.subr.mxu0 0.0
  %300 = vmatpush1.msra.mxu0 %v87
  %301 = vmatprep.subr.mxu0 0.0
  %302 = vmatpush1.msra.mxu0 %v291
  %303 = vmatprep.subr.mxu0 0.0
  %304 = vmatpush1.msra.mxu0 0.0
  %305 = vmatprep.subr.mxu0 0.0
  %306 = vmatpush1.msra.mxu0 0.0
  %307 = vmatprep.subr.mxu0 0.0
  %308 = vmatpush1.msra.mxu0 0.0
  %309 = vmatprep.subr.mxu0 0.0
  %310 = vmatpush1.msra.mxu0 0.0
  %311 = vmatprep.subr.mxu0 0.0
  %312 = vmatpush1.msra.mxu0 0.0
  %313 = vmatprep.subr.mxu0 0.0
  %314 = vmatpush1.msra.mxu0 0.0
  %315 = vmatprep.subr.mxu0 0.0
  %316 = vmatpush1.msra.mxu0 0.0
  %317 = vmatprep.subr.mxu0 0.0
  %318 = vmatpush1.msra.mxu0 0.0
  %319 = vmatprep.subr.mxu0 0.0
  %320 = vmatpush1.msra.mxu0 0.0
  %321 = vmatprep.subr.mxu0 0.0
  %322 = vmatpush1.msra.mxu0 0.0
  %323 = vmatprep.subr.mxu0 0.0
  %324 = vmatpush1.msra.mxu0 0.0
  %325 = vmatprep.subr.mxu0 0.0
  %326 = vmatpush1.msra.mxu0 0.0
  %327 = vmatprep.subr.mxu0 0.0
  %328 = vmatpush1.msra.mxu0 0.0
  %329 = vmatprep.subr.mxu0 0.0
  %330 = vmatpush1.msra.mxu0 0.0
  %331 = vmatprep.subr.mxu0 0.0
  %332 = vmatpush1.msra.mxu0 0.0
  %333 = vmatprep.subr.mxu0 0.0
  %334 = vmatpush1.msra.mxu0 0.0
  %335 = vmatprep.subr.mxu0 0.0
  %336 = vmatpush1.msra.mxu0 0.0
  %337 = vmatprep.subr.mxu0 0.0
  %338 = vmatpush1.msra.mxu0 0.0
  %339 = vmatprep.subr.mxu0 0.0
  %340 = vmatpush1.msra.mxu0 0.0
  %341 = vmatprep.subr.mxu0 0.0
  %342 = vmatpush1.msra.mxu0 0.0
  %343 = vmatprep.subr.mxu0 0.0
  %344 = vmatpush1.msra.mxu0 0.0
  %345 = vmatprep.subr.mxu0 0.0
  %346 = vmatpush1.msra.mxu0 0.0
  %347 = vmatprep.subr.mxu0 0.0
  %348 = vmatpush1.msra.mxu0 0.0
  %349 = vmatprep.subr.mxu0 0.0
  %350 = vmatpush1.msra.mxu0 0.0
  %351 = vmatprep.subr.mxu0 0.0
  %352 = vmatpush1.msra.mxu0 0.0
  %353 = vmatprep.subr.mxu0 0.0
  %354 = vmatpush1.msra.mxu0 0.0
  %355 = vmatprep.subr.mxu0 0.0
  %356 = vmatpush1.msra.mxu0 0.0
  %357 = vmatprep.mubr.f32.mxu0 0.0
  %358 = vmatmul.mubr.f32.gmra.mrb[0].mxu0 %v98
  %v359 = vpop.f32.mrb[0].mxu0
  %v360 = vadd.f32 %v94, %v359
  %v361 = vpop.f32.mrb[0].mxu0
  %362 = vmatprep.mubr.f32.mxu0 0.0
  %363 = vmatmul.mubr.f32.gmra.mrb[0].mxu0 %v101
  %v364 = vpop.f32.mrb[0].mxu0
  %v365 = vadd.f32 %v94, %v364
  %v366 = vpop.f32.mrb[0].mxu0
  %367 = vmatprep.mubr.f32.mxu0 0.0
  %368 = vmatmul.mubr.f32.gmra.mrb[0].mxu0 %v104
  %v369 = vpop.f32.mrb[0].mxu0
  %v370 = vadd.f32 %v94, %v369
  %v371 = vpop.f32.mrb[0].mxu0
  %372 = vmatprep.mubr.f32.mxu0 0.0
  %373 = vmatmul.mubr.f32.gmra.mrb[0].mxu0 %v107
  %v374 = vpop.f32.mrb[0].mxu0
  %v375 = vadd.f32 %v94, %v374
  %v376 = vpop.f32.mrb[0].mxu0
  %377 = vmatprep.mubr.f32.mxu0 0.0
  %378 = vmatmul.mubr.f32.gmra.mrb[0].mxu0 %v110
  %v379 = vpop.f32.mrb[0].mxu0
  %v380 = vadd.f32 %v94, %v379
  %v381 = vpop.f32.mrb[0].mxu0
  %382 = vmatprep.mubr.f32.mxu0 0.0
  %383 = vmatmul.mubr.f32.gmra.mrb[0].mxu0 %v113
  %v384 = vpop.f32.mrb[0].mxu0
  %v385 = vadd.f32 %v94, %v384
  %v386 = vpop.f32.mrb[0].mxu0
  %387 = vmatprep.mubr.f32.mxu0 0.0
  %388 = vmatmul.mubr.f32.gmra.mrb[0].mxu0 %v116
  %v389 = vpop.f32.mrb[0].mxu0
  %v390 = vadd.f32 %v94, %v389
  %v391 = vpop.f32.mrb[0].mxu0
  %392 = vmatprep.mubr.f32.mxu0 0.0
  %393 = vmatmul.mubr.f32.gmra.mrb[0].mxu0 %v119
  %v394 = vpop.f32.mrb[0].mxu0
  %v395 = vadd.f32 %v94, %v394
  %v396 = vpop.f32.mrb[0].mxu0
  %397 = vmatprep.mubr.f32.mxu0 0.0
  %398 = vmatmul.mubr.f32.gmra.mrb[0].mxu0 %v122
  %v399 = vpop.f32.mrb[0].mxu0
  %v400 = vadd.f32 %v94, %v399
  %v401 = vpop.f32.mrb[0].mxu0
  %402 = vmatprep.mubr.f32.mxu0 0.0
  %403 = vmatmul.mubr.f32.gmra.mrb[0].mxu0 %v125
  %v404 = vpop.f32.mrb[0].mxu0
  %v405 = vadd.f32 %v94, %v404
  %v406 = vpop.f32.mrb[0].mxu0
  %407 = vmatprep.mubr.f32.mxu0 0.0
  %408 = vmatmul.mubr.f32.gmra.mrb[0].mxu0 %v128
  %v409 = vpop.f32.mrb[0].mxu0
  %v410 = vadd.f32 %v94, %v409
  %v411 = vpop.f32.mrb[0].mxu0
  %412 = vmatprep.mubr.f32.mxu0 0.0
  %413 = vmatmul.mubr.f32.gmra.mrb[0].mxu0 %v131
  %v414 = vpop.f32.mrb[0].mxu0
  %v415 = vadd.f32 %v94, %v414
  %v416 = vpop.f32.mrb[0].mxu0
  %417 = vmatprep.mubr.f32.mxu0 0.0
  %418 = vmatmul.mubr.f32.gmra.mrb[0].mxu0 %v134
  %v419 = vpop.f32.mrb[0].mxu0
  %v420 = vadd.f32 %v94, %v419
  %v421 = vpop.f32.mrb[0].mxu0
  %422 = vmatprep.mubr.f32.mxu0 0.0
  %423 = vmatmul.mubr.f32.gmra.mrb[0].mxu0 %v137
  %v424 = vpop.f32.mrb[0].mxu0
  %v425 = vadd.f32 %v94, %v424
  %v426 = vpop.f32.mrb[0].mxu0
  %427 = vmatprep.mubr.f32.mxu0 0.0
  %428 = vmatmul.mubr.f32.gmra.mrb[0].mxu0 %v140
  %v429 = vpop.f32.mrb[0].mxu0
  %v430 = vadd.f32 %v94, %v429
  %v431 = vpop.f32.mrb[0].mxu0
  %432 = vmatprep.mubr.f32.mxu0 0.0
  %433 = vmatmul.mubr.f32.gmra.mrb[0].mxu0 %v143
  %v434 = vpop.f32.mrb[0].mxu0
  %v435 = vadd.f32 %v94, %v434
  %v436 = vpop.f32.mrb[0].mxu0
  %437 = vmatprep.mubr.f32.mxu0 0.0
  %438 = vmatmul.mubr.f32.gmra.mrb[0].mxu0 %v146
  %v439 = vpop.f32.mrb[0].mxu0
  %v440 = vadd.f32 %v94, %v439
  %v441 = vpop.f32.mrb[0].mxu0
  %442 = vmatprep.mubr.f32.mxu0 0.0
  %443 = vmatmul.mubr.f32.gmra.mrb[0].mxu0 %v149
  %v444 = vpop.f32.mrb[0].mxu0
  %v445 = vadd.f32 %v94, %v444
  %v446 = vpop.f32.mrb[0].mxu0
  %447 = vmatprep.mubr.f32.mxu0 0.0
  %448 = vmatmul.mubr.f32.gmra.mrb[0].mxu0 %v152
  %v449 = vpop.f32.mrb[0].mxu0
  %v450 = vadd.f32 %v94, %v449
  %v451 = vpop.f32.mrb[0].mxu0
  %452 = vmatprep.mubr.f32.mxu0 0.0
  %453 = vmatmul.mubr.f32.gmra.mrb[0].mxu0 %v155
  %v454 = vpop.f32.mrb[0].mxu0
  %v455 = vadd.f32 %v94, %v454
  %v456 = vpop.f32.mrb[0].mxu0
  %457 = vmatprep.mubr.f32.mxu0 0.0
  %458 = vmatmul.mubr.f32.gmra.mrb[0].mxu0 %v158
  %v459 = vpop.f32.mrb[0].mxu0
  %v460 = vadd.f32 %v94, %v459
  %v461 = vpop.f32.mrb[0].mxu0
  %462 = vmatprep.mubr.f32.mxu0 0.0
  %463 = vmatmul.mubr.f32.gmra.mrb[0].mxu0 %v161
  %v464 = vpop.f32.mrb[0].mxu0
  %v465 = vadd.f32 %v94, %v464
  %v466 = vpop.f32.mrb[0].mxu0
  %467 = vmatprep.mubr.f32.mxu0 0.0
  %468 = vmatmul.mubr.f32.gmra.mrb[0].mxu0 %v164
  %v469 = vpop.f32.mrb[0].mxu0
  %v470 = vadd.f32 %v94, %v469
  %v471 = vpop.f32.mrb[0].mxu0
  %472 = vmatprep.mubr.f32.mxu0 0.0
  %473 = vmatmul.mubr.f32.gmra.mrb[0].mxu0 %v167
  %v474 = vpop.f32.mrb[0].mxu0
  %v475 = vadd.f32 %v94, %v474
  %v476 = vpop.f32.mrb[0].mxu0
  %477 = vmatprep.mubr.f32.mxu0 0.0
  %478 = vmatmul.mubr.f32.gmra.mrb[0].mxu0 %v170
  %v479 = vpop.f32.mrb[0].mxu0
  %v480 = vadd.f32 %v94, %v479
  %v481 = vpop.f32.mrb[0].mxu0
  %482 = vmatprep.mubr.f32.mxu0 0.0
  %483 = vmatmul.mubr.f32.gmra.mrb[0].mxu0 %v173
  %v484 = vpop.f32.mrb[0].mxu0
  %v485 = vadd.f32 %v94, %v484
  %v486 = vpop.f32.mrb[0].mxu0
  %487 = vmatprep.mubr.f32.mxu0 0.0
  %488 = vmatmul.mubr.f32.gmra.mrb[0].mxu0 %v176
  %v489 = vpop.f32.mrb[0].mxu0
  %v490 = vadd.f32 %v94, %v489
  %v491 = vpop.f32.mrb[0].mxu0
  %492 = vmatprep.mubr.f32.mxu0 0.0
  %493 = vmatmul.mubr.f32.gmra.mrb[0].mxu0 %v179
  %v494 = vpop.f32.mrb[0].mxu0
  %v495 = vadd.f32 %v94, %v494
  %v496 = vpop.f32.mrb[0].mxu0
  %497 = vmatprep.mubr.f32.mxu0 0.0
  %498 = vmatmul.mubr.f32.gmra.mrb[0].mxu0 %v182
  %v499 = vpop.f32.mrb[0].mxu0
  %v500 = vadd.f32 %v94, %v499
  %v501 = vpop.f32.mrb[0].mxu0
  %502 = vmatprep.mubr.f32.mxu0 0.0
  %503 = vmatmul.mubr.f32.gmra.mrb[0].mxu0 %v185
  %v504 = vpop.f32.mrb[0].mxu0
  %v505 = vadd.f32 %v94, %v504
  %v506 = vpop.f32.mrb[0].mxu0
  %507 = vmatprep.mubr.f32.mxu0 0.0
  %508 = vmatmul.mubr.f32.gmra.mrb[0].mxu0 %v188
  %v509 = vpop.f32.mrb[0].mxu0
  %v510 = vadd.f32 %v94, %v509
  %v511 = vpop.f32.mrb[0].mxu0
  %512 = vmatprep.mubr.f32.mxu0 0.0
  %513 = vmatmul.mubr.f32.gmra.mrb[0].mxu0 %v191
  %v514 = vpop.f32.mrb[0].mxu0
  %v515 = vadd.f32 %v94, %v514
  %v516 = vpop.f32.mrb[0].mxu0
  %517 = vmatprep.mubr.f32.mxu0 0.0
  %518 = vmatmul.mubr.f32.gmra.mrb[0].mxu0 %v194
  %v519 = vpop.f32.mrb[0].mxu0
  %v520 = vadd.f32 %v94, %v519
  %v521 = vpop.f32.mrb[0].mxu0
  %522 = vmatprep.mubr.f32.mxu0 0.0
  %523 = vmatmul.mubr.f32.gmra.mrb[0].mxu0 %v197
  %v524 = vpop.f32.mrb[0].mxu0
  %v525 = vadd.f32 %v94, %v524
  %v526 = vpop.f32.mrb[0].mxu0
  %527 = vmatprep.mubr.f32.mxu0 0.0
  %528 = vmatmul.mubr.f32.gmra.mrb[0].mxu0 %v200
  %v529 = vpop.f32.mrb[0].mxu0
  %v530 = vadd.f32 %v94, %v529
  %v531 = vpop.f32.mrb[0].mxu0
  %532 = vmatprep.mubr.f32.mxu0 0.0
  %533 = vmatmul.mubr.f32.gmra.mrb[0].mxu0 %v203
  %v534 = vpop.f32.mrb[0].mxu0
  %v535 = vadd.f32 %v94, %v534
  %v536 = vpop.f32.mrb[0].mxu0
  %537 = vmatprep.mubr.f32.mxu0 0.0
  %538 = vmatmul.mubr.f32.gmra.mrb[0].mxu0 %v206
  %v539 = vpop.f32.mrb[0].mxu0
  %v540 = vadd.f32 %v94, %v539
  %v541 = vpop.f32.mrb[0].mxu0
  %542 = vmatprep.mubr.f32.mxu0 0.0
  %543 = vmatmul.mubr.f32.gmra.mrb[0].mxu0 %v209
  %v544 = vpop.f32.mrb[0].mxu0
  %v545 = vadd.f32 %v94, %v544
  %v546 = vpop.f32.mrb[0].mxu0
  %547 = vmatprep.mubr.f32.mxu0 0.0
  %548 = vmatmul.mubr.f32.gmra.mrb[0].mxu0 %v212
  %v549 = vpop.f32.mrb[0].mxu0
  %v550 = vadd.f32 %v94, %v549
  %v551 = vpop.f32.mrb[0].mxu0
  %552 = vmatprep.mubr.f32.mxu0 0.0
  %553 = vmatmul.mubr.f32.gmra.mrb[0].mxu0 %v215
  %v554 = vpop.f32.mrb[0].mxu0
  %v555 = vadd.f32 %v94, %v554
  %v556 = vpop.f32.mrb[0].mxu0
  %557 = vmatprep.mubr.f32.mxu0 0.0
  %558 = vmatmul.mubr.f32.gmra.mrb[0].mxu0 %v218
  %v559 = vpop.f32.mrb[0].mxu0
  %v560 = vadd.f32 %v94, %v559
  %v561 = vpop.f32.mrb[0].mxu0
  %562 = vmatprep.mubr.f32.mxu0 0.0
  %563 = vmatmul.mubr.f32.gmra.mrb[0].mxu0 %v221
  %v564 = vpop.f32.mrb[0].mxu0
  %v565 = vadd.f32 %v94, %v564
  %v566 = vpop.f32.mrb[0].mxu0
  %567 = vmatprep.mubr.f32.mxu0 0.0
  %568 = vmatmul.mubr.f32.gmra.mrb[0].mxu0 %v224
  %v569 = vpop.f32.mrb[0].mxu0
  %v570 = vadd.f32 %v94, %v569
  %v571 = vpop.f32.mrb[0].mxu0
  %572 = vmatprep.mubr.f32.mxu0 0.0
  %573 = vmatmul.mubr.f32.gmra.mrb[0].mxu0 %v227
  %v574 = vpop.f32.mrb[0].mxu0
  %v575 = vadd.f32 %v94, %v574
  %v576 = vpop.f32.mrb[0].mxu0
  %577 = vmatprep.mubr.f32.mxu0 0.0
  %578 = vmatmul.mubr.f32.gmra.mrb[0].mxu0 %v230
  %v579 = vpop.f32.mrb[0].mxu0
  %v580 = vadd.f32 %v94, %v579
  %v581 = vpop.f32.mrb[0].mxu0
  %582 = vmatprep.mubr.f32.mxu0 0.0
  %583 = vmatmul.mubr.f32.gmra.mrb[0].mxu0 %v233
  %v584 = vpop.f32.mrb[0].mxu0
  %v585 = vadd.f32 %v94, %v584
  %v586 = vpop.f32.mrb[0].mxu0
  %587 = vmatprep.mubr.f32.mxu0 0.0
  %588 = vmatmul.mubr.f32.gmra.mrb[0].mxu0 %v236
  %v589 = vpop.f32.mrb[0].mxu0
  %v590 = vadd.f32 %v94, %v589
  %v591 = vpop.f32.mrb[0].mxu0
  %592 = vmatprep.mubr.f32.mxu0 0.0
  %593 = vmatmul.mubr.f32.gmra.mrb[0].mxu0 %v239
  %v594 = vpop.f32.mrb[0].mxu0
  %v595 = vadd.f32 %v94, %v594
  %v596 = vpop.f32.mrb[0].mxu0
  %597 = vmatprep.mubr.f32.mxu0 0.0
  %598 = vmatmul.mubr.f32.gmra.mrb[0].mxu0 %v242
  %v599 = vpop.f32.mrb[0].mxu0
  %v600 = vadd.f32 %v94, %v599
  %v601 = vpop.f32.mrb[0].mxu0
  %602 = vmatprep.mubr.f32.mxu0 0.0
  %603 = vmatmul.mubr.f32.gmra.mrb[0].mxu0 %v245
  %v604 = vpop.f32.mrb[0].mxu0
  %v605 = vadd.f32 %v94, %v604
  %v606 = vpop.f32.mrb[0].mxu0
  %607 = vmatprep.mubr.f32.mxu0 0.0
  %608 = vmatmul.mubr.f32.gmra.mrb[0].mxu0 %v248
  %v609 = vpop.f32.mrb[0].mxu0
  %v610 = vadd.f32 %v94, %v609
  %v611 = vpop.f32.mrb[0].mxu0
  %612 = vmatprep.mubr.f32.mxu0 0.0
  %613 = vmatmul.mubr.f32.gmra.mrb[0].mxu0 %v251
  %v614 = vpop.f32.mrb[0].mxu0
  %v615 = vadd.f32 %v94, %v614
  %v616 = vpop.f32.mrb[0].mxu0
  %617 = vmatprep.mubr.f32.mxu0 0.0
  %618 = vmatmul.mubr.f32.gmra.mrb[0].mxu0 %v254
  %v619 = vpop.f32.mrb[0].mxu0
  %v620 = vadd.f32 %v94, %v619
  %v621 = vpop.f32.mrb[0].mxu0
  %622 = vmatprep.mubr.f32.mxu0 0.0
  %623 = vmatmul.mubr.f32.gmra.mrb[0].mxu0 %v257
  %v624 = vpop.f32.mrb[0].mxu0
  %v625 = vadd.f32 %v94, %v624
  %v626 = vpop.f32.mrb[0].mxu0
  %627 = vmatprep.mubr.f32.mxu0 0.0
  %628 = vmatmul.mubr.f32.gmra.mrb[0].mxu0 %v260
  %v629 = vpop.f32.mrb[0].mxu0
  %v630 = vadd.f32 %v94, %v629
  %v631 = vpop.f32.mrb[0].mxu0
  %632 = vmatprep.mubr.f32.mxu0 0.0
  %633 = vmatmul.mubr.f32.gmra.mrb[0].mxu0 %v263
  %v634 = vpop.f32.mrb[0].mxu0
  %v635 = vadd.f32 %v94, %v634
  %v636 = vpop.f32.mrb[0].mxu0
  %637 = vmatprep.mubr.f32.mxu0 0.0
  %638 = vmatmul.mubr.f32.gmra.mrb[0].mxu0 %v266
  %v639 = vpop.f32.mrb[0].mxu0
  %v640 = vadd.f32 %v94, %v639
  %v641 = vpop.f32.mrb[0].mxu0
  %642 = vmatprep.mubr.f32.mxu0 0.0
  %643 = vmatmul.mubr.f32.gmra.mrb[0].mxu0 %v269
  %v644 = vpop.f32.mrb[0].mxu0
  %v645 = vadd.f32 %v94, %v644
  %v646 = vpop.f32.mrb[0].mxu0
  %647 = vmatprep.mubr.f32.mxu0 0.0
  %648 = vmatmul.mubr.f32.gmra.mrb[0].mxu0 %v272
  %v649 = vpop.f32.mrb[0].mxu0
  %v650 = vadd.f32 %v94, %v649
  %v651 = vpop.f32.mrb[0].mxu0
  %652 = vmatprep.mubr.f32.mxu0 0.0
  %653 = vmatmul.mubr.f32.gmra.mrb[0].mxu0 %v275
  %v654 = vpop.f32.mrb[0].mxu0
  %v655 = vadd.f32 %v94, %v654
  %v656 = vpop.f32.mrb[0].mxu0
  %657 = vmatprep.mubr.f32.mxu0 0.0
  %658 = vmatmul.mubr.f32.gmra.mrb[0].mxu0 %v278
  %v659 = vpop.f32.mrb[0].mxu0
  %v660 = vadd.f32 %v94, %v659
  %v661 = vpop.f32.mrb[0].mxu0
  %662 = vmatprep.mubr.f32.mxu0 0.0
  %663 = vmatmul.mubr.f32.gmra.mrb[0].mxu0 %v281
  %v664 = vpop.f32.mrb[0].mxu0
  %v665 = vadd.f32 %v94, %v664
  %v666 = vpop.f32.mrb[0].mxu0
  %667 = vmatprep.mubr.f32.mxu0 0.0
  %668 = vmatmul.mubr.f32.gmra.mrb[0].mxu0 %v284
  %v669 = vpop.f32.mrb[0].mxu0
  %v670 = vadd.f32 %v94, %v669
  %v671 = vpop.f32.mrb[0].mxu0
  %672 = vmatprep.mubr.f32.mxu0 0.0
  %673 = vmatmul.mubr.f32.gmra.mrb[0].mxu0 %v287
  %v674 = vpop.f32.mrb[0].mxu0
  %v675 = vadd.f32 %v94, %v674
  %v676 = vpop.f32.mrb[0].mxu0
  %677 = vdwg.mxu0
  %v678 = vmax.f32 %v360, 0.0
  %v679 = vmax.f32 %v365, 0.0
  %v680 = vmax.f32 %v370, 0.0
  %v681 = vmax.f32 %v375, 0.0
  %v682 = vmax.f32 %v380, 0.0
  %v683 = vmax.f32 %v385, 0.0
  %v684 = vmax.f32 %v390, 0.0
  %v685 = vmax.f32 %v395, 0.0
  %v686 = vmax.f32 %v400, 0.0
  %v687 = vmax.f32 %v405, 0.0
  %v688 = vmax.f32 %v410, 0.0
  %v689 = vmax.f32 %v415, 0.0
  %v690 = vmax.f32 %v420, 0.0
  %v691 = vmax.f32 %v425, 0.0
  %v692 = vmax.f32 %v430, 0.0
  %v693 = vmax.f32 %v435, 0.0
  %v694 = vmax.f32 %v440, 0.0
  %v695 = vmax.f32 %v445, 0.0
  %v696 = vmax.f32 %v450, 0.0
  %v697 = vmax.f32 %v455, 0.0
  %v698 = vmax.f32 %v460, 0.0
  %v699 = vmax.f32 %v465, 0.0
  %v700 = vmax.f32 %v470, 0.0
  %v701 = vmax.f32 %v475, 0.0
  %v702 = vmax.f32 %v480, 0.0
  %v703 = vmax.f32 %v485, 0.0
  %v704 = vmax.f32 %v490, 0.0
  %v705 = vmax.f32 %v495, 0.0
  %v706 = vmax.f32 %v500, 0.0
  %v707 = vmax.f32 %v505, 0.0
  %v708 = vmax.f32 %v510, 0.0
  %v709 = vmax.f32 %v515, 0.0
  %v710 = vmax.f32 %v520, 0.0
  %v711 = vmax.f32 %v525, 0.0
  %v712 = vmax.f32 %v530, 0.0
  %v713 = vmax.f32 %v535, 0.0
  %v714 = vmax.f32 %v540, 0.0
  %v715 = vmax.f32 %v545, 0.0
  %v716 = vmax.f32 %v550, 0.0
  %v717 = vmax.f32 %v555, 0.0
  %v718 = vmax.f32 %v560, 0.0
  %v719 = vmax.f32 %v565, 0.0
  %v720 = vmax.f32 %v570, 0.0
  %v721 = vmax.f32 %v575, 0.0
  %v722 = vmax.f32 %v580, 0.0
  %v723 = vmax.f32 %v585, 0.0
  %v724 = vmax.f32 %v590, 0.0
  %v725 = vmax.f32 %v595, 0.0
  %v726 = vmax.f32 %v600, 0.0
  %v727 = vmax.f32 %v605, 0.0
  %v728 = vmax.f32 %v610, 0.0
  %v729 = vmax.f32 %v615, 0.0
  %v730 = vmax.f32 %v620, 0.0
  %v731 = vmax.f32 %v625, 0.0
  %v732 = vmax.f32 %v630, 0.0
  %v733 = vmax.f32 %v635, 0.0
  %v734 = vmax.f32 %v640, 0.0
  %v735 = vmax.f32 %v645, 0.0
  %v736 = vmax.f32 %v650, 0.0
  %v737 = vmax.f32 %v655, 0.0
  %v738 = vmax.f32 %v660, 0.0
  %v739 = vmax.f32 %v665, 0.0
  %v740 = vmax.f32 %v670, 0.0
  %v741 = vmax.f32 %v675, 0.0
  %vm742 = vcmask 261120
  %v743 = vsel %vm742, %v678, 0.0
  %v744 = vsel %vm742, %v679, 0.0
  %v745 = vadd.f32 %v743, %v744
  %v746 = vsel %vm742, %v680, 0.0
  %v747 = vadd.f32 %v745, %v746
  %v748 = vsel %vm742, %v681, 0.0
  %v749 = vadd.f32 %v747, %v748
  %v750 = vsel %vm742, %v682, 0.0
  %v751 = vadd.f32 %v749, %v750
  %v752 = vsel %vm742, %v683, 0.0
  %v753 = vadd.f32 %v751, %v752
  %v754 = vsel %vm742, %v684, 0.0
  %v755 = vadd.f32 %v753, %v754
  %v756 = vsel %vm742, %v685, 0.0
  %v757 = vadd.f32 %v755, %v756
  %v758 = vsel %vm742, %v686, 0.0
  %v759 = vadd.f32 %v757, %v758
  %v760 = vsel %vm742, %v687, 0.0
  %v761 = vadd.f32 %v759, %v760
  %v762 = vsel %vm742, %v688, 0.0
  %v763 = vadd.f32 %v761, %v762
  %v764 = vsel %vm742, %v689, 0.0
  %v765 = vadd.f32 %v763, %v764
  %v766 = vsel %vm742, %v690, 0.0
  %v767 = vadd.f32 %v765, %v766
  %v768 = vsel %vm742, %v691, 0.0
  %v769 = vadd.f32 %v767, %v768
  %v770 = vsel %vm742, %v692, 0.0
  %v771 = vadd.f32 %v769, %v770
  %v772 = vsel %vm742, %v693, 0.0
  %v773 = vadd.f32 %v771, %v772
  %v774 = vsel %vm742, %v694, 0.0
  %v775 = vadd.f32 %v773, %v774
  %v776 = vsel %vm742, %v695, 0.0
  %v777 = vadd.f32 %v775, %v776
  %v778 = vsel %vm742, %v696, 0.0
  %v779 = vadd.f32 %v777, %v778
  %v780 = vsel %vm742, %v697, 0.0
  %v781 = vadd.f32 %v779, %v780
  %v782 = vsel %vm742, %v698, 0.0
  %v783 = vadd.f32 %v781, %v782
  %v784 = vsel %vm742, %v699, 0.0
  %v785 = vadd.f32 %v783, %v784
  %v786 = vsel %vm742, %v700, 0.0
  %v787 = vadd.f32 %v785, %v786
  %v788 = vsel %vm742, %v701, 0.0
  %v789 = vadd.f32 %v787, %v788
  %v790 = vsel %vm742, %v702, 0.0
  %v791 = vadd.f32 %v789, %v790
  %v792 = vsel %vm742, %v703, 0.0
  %v793 = vadd.f32 %v791, %v792
  %v794 = vsel %vm742, %v704, 0.0
  %v795 = vadd.f32 %v793, %v794
  %v796 = vsel %vm742, %v705, 0.0
  %v797 = vadd.f32 %v795, %v796
  %v798 = vsel %vm742, %v706, 0.0
  %v799 = vadd.f32 %v797, %v798
  %v800 = vsel %vm742, %v707, 0.0
  %v801 = vadd.f32 %v799, %v800
  %v802 = vsel %vm742, %v708, 0.0
  %v803 = vadd.f32 %v801, %v802
  %v804 = vsel %vm742, %v709, 0.0
  %v805 = vadd.f32 %v803, %v804
  %v806 = vrot.slane %v805, 4
  %v807 = vadd.f32 %v805, %v806
  %v808 = vrot.slane %v807, 2
  %v809 = vadd.f32 %v807, %v808
  %v810 = vrot.slane %v809, 1
  %v811 = vadd.f32 %v809, %v810
  %v812 = vsel %vm742, %v710, 0.0
  %v813 = vsel %vm742, %v711, 0.0
  %v814 = vadd.f32 %v812, %v813
  %v815 = vsel %vm742, %v712, 0.0
  %v816 = vadd.f32 %v814, %v815
  %v817 = vsel %vm742, %v713, 0.0
  %v818 = vadd.f32 %v816, %v817
  %v819 = vsel %vm742, %v714, 0.0
  %v820 = vadd.f32 %v818, %v819
  %v821 = vsel %vm742, %v715, 0.0
  %v822 = vadd.f32 %v820, %v821
  %v823 = vsel %vm742, %v716, 0.0
  %v824 = vadd.f32 %v822, %v823
  %v825 = vsel %vm742, %v717, 0.0
  %v826 = vadd.f32 %v824, %v825
  %v827 = vsel %vm742, %v718, 0.0
  %v828 = vadd.f32 %v826, %v827
  %v829 = vsel %vm742, %v719, 0.0
  %v830 = vadd.f32 %v828, %v829
  %v831 = vsel %vm742, %v720, 0.0
  %v832 = vadd.f32 %v830, %v831
  %v833 = vsel %vm742, %v721, 0.0
  %v834 = vadd.f32 %v832, %v833
  %v835 = vsel %vm742, %v722, 0.0
  %v836 = vadd.f32 %v834, %v835
  %v837 = vsel %vm742, %v723, 0.0
  %v838 = vadd.f32 %v836, %v837
  %v839 = vsel %vm742, %v724, 0.0
  %v840 = vadd.f32 %v838, %v839
  %v841 = vsel %vm742, %v725, 0.0
  %v842 = vadd.f32 %v840, %v841
  %v843 = vsel %vm742, %v726, 0.0
  %v844 = vadd.f32 %v842, %v843
  %v845 = vsel %vm742, %v727, 0.0
  %v846 = vadd.f32 %v844, %v845
  %v847 = vsel %vm742, %v728, 0.0
  %v848 = vadd.f32 %v846, %v847
  %v849 = vsel %vm742, %v729, 0.0
  %v850 = vadd.f32 %v848, %v849
  %v851 = vsel %vm742, %v730, 0.0
  %v852 = vadd.f32 %v850, %v851
  %v853 = vsel %vm742, %v731, 0.0
  %v854 = vadd.f32 %v852, %v853
  %v855 = vsel %vm742, %v732, 0.0
  %v856 = vadd.f32 %v854, %v855
  %v857 = vsel %vm742, %v733, 0.0
  %v858 = vadd.f32 %v856, %v857
  %v859 = vsel %vm742, %v734, 0.0
  %v860 = vadd.f32 %v858, %v859
  %v861 = vsel %vm742, %v735, 0.0
  %v862 = vadd.f32 %v860, %v861
  %v863 = vsel %vm742, %v736, 0.0
  %v864 = vadd.f32 %v862, %v863
  %v865 = vsel %vm742, %v737, 0.0
  %v866 = vadd.f32 %v864, %v865
  %v867 = vsel %vm742, %v738, 0.0
  %v868 = vadd.f32 %v866, %v867
  %v869 = vsel %vm742, %v739, 0.0
  %v870 = vadd.f32 %v868, %v869
  %v871 = vsel %vm742, %v740, 0.0
  %v872 = vadd.f32 %v870, %v871
  %v873 = vsel %vm742, %v741, 0.0
  %v874 = vadd.f32 %v872, %v873
  %v875 = vrot.slane %v874, 4
  %v876 = vadd.f32 %v874, %v875
  %v877 = vrot.slane %v876, 2
  %v878 = vadd.f32 %v876, %v877
  %v879 = vrot.slane %v878, 1
  %v880 = vadd.f32 %v878, %v879
  %v881 = vmul.f32 %v811, 0.00390625
  %v882 = vmul.f32 %v880, 0.00390625
  %v883 = vld [vmem:[%s3] sm:$0xff]
  %v884 = vld [vmem:[%s3 + $0x8] sm:$0xff]
  %v885 = vld [vmem:[%s3 + $0x10] sm:$0xff]
  %v886 = vld [vmem:[%s3 + $0x18] sm:$0xff]
  %v887 = vld [vmem:[%s4] sm:$0x1]
  %v889 = vlaneseq
  %v890 = vshrl.u32 %v889, 7
  %v891 = vsub.s32 0, %v890
  %v892 = vrot.slane %v887, %v891
  %vm896 = vcmask 1041409
  %v897 = vsel %vm896, %v882, %v881
  %v898 = vsel %vm742, %v897, 0
  %900 = vmatprep.subr.mxu0 0.0
  %901 = vmatpush1.msra.mxu0 %v883
  %902 = vmatprep.subr.mxu0 0.0
  %903 = vmatpush1.msra.mxu0 %v884
  %904 = vmatprep.subr.mxu0 0.0
  %905 = vmatpush1.msra.mxu0 %v885
  %906 = vmatprep.subr.mxu0 0.0
  %907 = vmatpush1.msra.mxu0 %v886
  %908 = vmatprep.subr.mxu0 0.0
  %909 = vmatpush1.msra.mxu0 0.0
  %910 = vmatprep.subr.mxu0 0.0
  %911 = vmatpush1.msra.mxu0 0.0
  %912 = vmatprep.subr.mxu0 0.0
  %913 = vmatpush1.msra.mxu0 0.0
  %914 = vmatprep.subr.mxu0 0.0
  %915 = vmatpush1.msra.mxu0 0.0
  %916 = vmatprep.subr.mxu0 0.0
  %917 = vmatpush1.msra.mxu0 0.0
  %918 = vmatprep.subr.mxu0 0.0
  %919 = vmatpush1.msra.mxu0 0.0
  %920 = vmatprep.subr.mxu0 0.0
  %921 = vmatpush1.msra.mxu0 0.0
  %922 = vmatprep.subr.mxu0 0.0
  %923 = vmatpush1.msra.mxu0 0.0
  %924 = vmatprep.subr.mxu0 0.0
  %925 = vmatpush1.msra.mxu0 0.0
  %926 = vmatprep.subr.mxu0 0.0
  %927 = vmatpush1.msra.mxu0 0.0
  %928 = vmatprep.subr.mxu0 0.0
  %929 = vmatpush1.msra.mxu0 0.0
  %930 = vmatprep.subr.mxu0 0.0
  %931 = vmatpush1.msra.mxu0 0.0
  %932 = vmatprep.subr.mxu0 0.0
  %933 = vmatpush1.msra.mxu0 0.0
  %934 = vmatprep.subr.mxu0 0.0
  %935 = vmatpush1.msra.mxu0 0.0
  %936 = vmatprep.subr.mxu0 0.0
  %937 = vmatpush1.msra.mxu0 0.0
  %938 = vmatprep.subr.mxu0 0.0
  %939 = vmatpush1.msra.mxu0 0.0
  %940 = vmatprep.subr.mxu0 0.0
  %941 = vmatpush1.msra.mxu0 0.0
  %942 = vmatprep.subr.mxu0 0.0
  %943 = vmatpush1.msra.mxu0 0.0
  %944 = vmatprep.subr.mxu0 0.0
  %945 = vmatpush1.msra.mxu0 0.0
  %946 = vmatprep.subr.mxu0 0.0
  %947 = vmatpush1.msra.mxu0 0.0
  %948 = vmatprep.subr.mxu0 0.0
  %949 = vmatpush1.msra.mxu0 0.0
  %950 = vmatprep.subr.mxu0 0.0
  %951 = vmatpush1.msra.mxu0 0.0
  %952 = vmatprep.subr.mxu0 0.0
  %953 = vmatpush1.msra.mxu0 0.0
  %954 = vmatprep.subr.mxu0 0.0
  %955 = vmatpush1.msra.mxu0 0.0
  %956 = vmatprep.subr.mxu0 0.0
  %957 = vmatpush1.msra.mxu0 0.0
  %958 = vmatprep.subr.mxu0 0.0
  %959 = vmatpush1.msra.mxu0 0.0
  %960 = vmatprep.subr.mxu0 0.0
  %961 = vmatpush1.msra.mxu0 0.0
  %962 = vmatprep.subr.mxu0 0.0
  %963 = vmatpush1.msra.mxu0 0.0
  %964 = vmatprep.mubr.f32.mxu0 0.0
  %965 = vmatmul.mubr.f32.gmra.mrb[0].mxu0 %v898
  %v966 = vpop.f32.mrb[0].mxu0
  %v967 = vadd.f32 %v892, %v966
  %v968 = vpop.f32.mrb[0].mxu0
  %969 = vdwg.mxu0
  %v970 = vlaneseq
  %v971 = vand.u32 %v970, 127
  %vm972 = vcmp.lt.s32.totalorder %v971, 16
  %v973 = vsel %vm972, %v967, -3.4028235e+38
  %vm974 = vcmask 1041408
  %v975 = vsel %vm974, %v973, -inf
  %976 = vmax.xlane.f32.xlu0 %v975
  %v977 = vpop.xlane.xlu0 %976
  %vm978 = vcmp.eq.f32.partialorder %v973, %v977
  %v979 = vsel %vm978, %v971, 2147483647
  %v980 = vsel %vm974, %v979, 2147483647
  %v981 = vand.u32 %v980, 65535
  %v982 = vshra.s32 %v980, 16
  %v983 = vcvt.s32.f32 %v981
  %v984 = vcvt.s32.f32 %v982
  %985 = vmin.xlane.f32.xlu0 %v984
  %v986 = vpop.xlane.xlu0 %985
  %vm987 = vcmp.eq.f32.partialorder %v984, %v986
  %v988 = vsel %vm987, %v983, inf
  %989 = vmin.xlane.f32.xlu0 %v988
  %v990 = vpop.xlane.xlu0 %989
  %v991 = vcvt.f32.s32 %v990
  %v992 = vcvt.f32.s32 %v986
  %v993 = vshll.u32 %v992, 16
  %v994 = vadd.s32 %v993, %v991
  %vm995 = vcmp.eq.s32.totalorder %v971, 16
  %v996 = vcvt.s32.f32 %v994
  %v997 = vsel %vm995, %v996, %v967
  %998 = vst [vmem:[%s5] sm:$0x3] %v997
  // Predicated region
  $region22: #{method_forward.1} parent=0 // pred_check
    _
  $region23: #{method_forward.1} parent=0 // pred_check_branch
    %1000 = sbr.rel (0) target = $region25
  $region24: #{method_forward.1} parent=0 // pred_region
    _
  $region25: #{method_forward.1} parent=0 // pred_fallthru
    _
  // Predicated region
  $region26: #{method_forward.1} parent=0 // pred_check
    _
  $region27: #{method_forward.1} parent=0 // pred_check_branch
    %1002 = sbr.rel (0) target = $region29
  $region28: #{method_forward.1} parent=0 // pred_region
    _
  $region29: #{method_forward.1} parent=0 // pred_fallthru
    _

</llo_original>
